<compile_context>
chip_gen: v5e
topology: v5e:2x2
jax: 0.10.0
libtpu: 0.0.40
codegen_flags: <defaults>
</compile_context>

<pallas_src>
import functools
import numpy as np
import jax
import jax.numpy as jnp
from jax.experimental import pallas as pl
from jax.experimental.pallas import tpu as pltpu


INCHS = [256, 128, 64, 32, 16, 8]
OUTCHS = [512, 256, 128, 64, 32, 16]
SIZES = [(3, 3), (7, 7), (14, 14), (28, 28), (56, 56), (112, 112)]
FINALS = [True, False, False, False, False, False]

# Safe scoped-VMEM limit on every generation (v7x physical VMEM is only 64 MiB).
_VMEM_LIMIT = 32 * 1024 * 1024


def _round_up(x, m):
    return ((x + m - 1) // m) * m


def _choose_m_tiling(m, target=512):
    """Return (padded M, tile) with tile a multiple of 8 that divides padded M."""
    mp = _round_up(max(m, 8), 8)
    if mp <= target:
        return mp, mp
    for tm in range(target, 63, -8):
        if mp % tm == 0:
            return mp, tm
    mp = _round_up(mp, target)
    return mp, target


# ----------------------------------------------------------------------------
# Pallas kernels
# ----------------------------------------------------------------------------
def _mm_bias_act_kernel(x_ref, w_ref, b_ref, o_ref, *, negative_slope):
    """One M-tile of: act(x @ w + b), f32 accumulation on the MXU."""
    acc = jnp.dot(x_ref[...], w_ref[...], preferred_element_type=jnp.float32)
    acc = acc + b_ref[...]
    if negative_slope is not None:
        acc = jnp.where(acc >= 0.0, acc, negative_slope * acc)
    o_ref[...] = acc.astype(o_ref.dtype)


def _conv3x3_kernel(x_ref, w_ref, b_ref, o_ref, *, wp, me, cout,
                    negative_slope, chunk):
    """3x3 / pad-1 conv on one NHWC image, flattened spatially.

    x_ref: (Sp, Cin)   zero-padded image, row p = y*(W+2)+x
    w_ref: (9, Cin, Cout) taps-major weights
    b_ref: (1, Cout) f32 bias
    o_ref: (Me, Cout)  extended output (columns x>=W are garbage, sliced on host)
    """
    for m0 in range(0, me, chunk):
        mc = min(chunk, me - m0)
        acc = jnp.zeros((mc, cout), jnp.float32)
        for t in range(9):
            off = (t // 3) * wp + (t % 3)
            lhs = x_ref[m0 + off:m0 + off + mc, :]
            acc = acc + jnp.dot(lhs, w_ref[t],
                                preferred_element_type=jnp.float32)
        acc = acc + b_ref[...]
        if negative_slope is not None:
            acc = jnp.where(acc >= 0.0, acc, negative_slope * acc)
        o_ref[m0:m0 + mc, :] = acc.astype(o_ref.dtype)


def _pool_kernel(ph_ref, pw_ref, x_ref, o_ref):
    """Adaptive average pool of one NHWC image: (H, W*C) -> (Ho, Wo*C)."""
    t = jnp.dot(x_ref[...], pw_ref[...], preferred_element_type=jnp.float32)
    o = jnp.dot(ph_ref[...], t.astype(jnp.bfloat16),
                preferred_element_type=jnp.float32)
    o_ref[...] = o.astype(o_ref.dtype)


def _blend_kernel(alpha_ref, a_ref, b_ref, o_ref):
    """(1 - alpha) * a + alpha * b with alpha coming from a (1,1) device array."""
    al = alpha_ref[...].astype(jnp.float32)
    av = a_ref[...].astype(jnp.float32)
    bv = b_ref[...].astype(jnp.float32)
    o_ref[...] = ((1.0 - al) * av + al * bv).astype(o_ref.dtype)


# ----------------------------------------------------------------------------
# Kernel wrappers
# ----------------------------------------------------------------------------
def matmul_bias_act(x, w, b, negative_slope=None, out_dtype=jnp.bfloat16):
    """out = act(x @ w + b).  x:(M,K), w:(K,N) bf16, b:(1,N) f32 -> (M,N)."""
    m, k = x.shape
    n = w.shape[1]
    mp, tm = _choose_m_tiling(m)
    xb = x.astype(jnp.bfloat16)
    if mp != m:
        xb = jnp.pad(xb, ((0, mp - m), (0, 0)))
    kernel = functools.partial(_mm_bias_act_kernel, negative_slope=negative_slope)
    out = pl.pallas_call(
        kernel,
        out_shape=jax.ShapeDtypeStruct((mp, n), out_dtype),
        grid=(mp // tm,),
        in_specs=[pl.BlockSpec((tm, k), lambda i: (i, 0)),
                  pl.BlockSpec((k, n), lambda i: (0, 0)),
                  pl.BlockSpec((1, n), lambda i: (0, 0))],
        out_specs=pl.BlockSpec((tm, n), lambda i: (i, 0)),
        compiler_params=pltpu.CompilerParams(
            dimension_semantics=("parallel",),
            vmem_limit_bytes=_VMEM_LIMIT),
    )(xb, w, b)
    return out[:m] if mp != m else out


def conv3x3_same(x, p, negative_slope=0.2, out_dtype=jnp.bfloat16):
    """3x3 conv, padding=1, NHWC, fused bias + LeakyReLU.  No im2col in HBM."""
    bsz, h, w, c = x.shape
    wt, bias, cout = p["w"], p["b"], p["cout"]
    kp = wt.shape[1]                     # channel-padded Cin (multiple of 8)
    cpad = wt.shape[2]                   # channel-padded Cout (multiple of 8)
    xb = x.astype(jnp.bfloat16)
    if c != kp:                          # e.g. MiniBatchStd output 257 -> 264
        xb = jnp.pad(xb, ((0, 0), (0, 0), (0, 0), (0, kp - c)))
    wp = w + 2
    sp = (h + 3) * wp
    me = h * wp
    # zero-pad spatially (1 top, 2 bottom, 1 left, 1 right) and flatten (free reshape)
    xf = jnp.pad(xb, ((0, 0), (1, 2), (1, 1), (0, 0))).reshape(bsz, sp, kp)
    chunk = min(me, 4096)
    kernel = functools.partial(_conv3x3_kernel, wp=wp, me=me, cout=cpad,
                               negative_slope=negative_slope, chunk=chunk)
    out = pl.pallas_call(
        kernel,
        out_shape=jax.ShapeDtypeStruct((bsz, me, cpad), out_dtype),
        grid=(bsz,),
        in_specs=[pl.BlockSpec((None, sp, kp), lambda i: (i, 0, 0)),
                  pl.BlockSpec((9, kp, cpad), lambda i: (0, 0, 0)),
                  pl.BlockSpec((1, cpad), lambda i: (0, 0))],
        out_specs=pl.BlockSpec((None, me, cpad), lambda i: (i, 0, 0)),
        compiler_params=pltpu.CompilerParams(
            dimension_semantics=("parallel",),
            vmem_limit_bytes=_VMEM_LIMIT),
    )(xf, wt, bias)
    out = out.reshape(bsz, h, wp, cpad)[:, :, :w, :cout]
    return out


def conv1x1(x, p, negative_slope=None, out_dtype=jnp.bfloat16):
    """1x1 conv in NHWC via the tiled matmul kernel."""
    bsz, h, w, c = x.shape
    kp = p["w"].shape[0]
    x2 = x.reshape(bsz * h * w, c)
    if c != kp:
        x2 = jnp.pad(x2, ((0, 0), (0, kp - c)))
    y = matmul_bias_act(x2, p["w"], p["b"], negative_slope=negative_slope,
                        out_dtype=out_dtype)
    cout = p["cout"]
    if y.shape[1] != cout:
        y = y[:, :cout]
    return y.reshape(bsz, h, w, cout)


def _adaptive_pool_matrix(insize, outsize):
    pmat = np.zeros((outsize, insize), np.float32)
    for i in range(outsize):
        s = (i * insize) // outsize
        e = -(-((i + 1) * insize) // outsize)   # ceil -> matches torch adaptive pool
        pmat[i, s:e] = 1.0 / (e - s)
    return pmat


def adaptive_avg_pool_nhwc(x, out_hw, out_dtype=jnp.bfloat16):
    """NHWC adaptive average pool, one fused Pallas kernel per image."""
    bsz, h, w, c = x.shape
    ho, wo = int(out_hw[0]), int(out_hw[1])
    hp = _round_up(h, 8)
    ph_np = np.zeros((ho, hp), np.float32)
    ph_np[:, :h] = _adaptive_pool_matrix(h, ho)
    ph = jnp.asarray(ph_np, jnp.bfloat16)                                  # (Ho, Hp)
    pw_np = np.kron(_adaptive_pool_matrix(w, wo),
                    np.eye(c, dtype=np.float32)).T                         # (W*C, Wo*C)
    pw = jnp.asarray(pw_np, jnp.bfloat16)
    xr = x.astype(jnp.bfloat16).reshape(bsz, h, w * c)
    if hp != h:
        xr = jnp.pad(xr, ((0, 0), (0, hp - h), (0, 0)))
    out = pl.pallas_call(
        _pool_kernel,
        out_shape=jax.ShapeDtypeStruct((bsz, ho, wo * c), out_dtype),
        grid=(bsz,),
        in_specs=[pl.BlockSpec((ho, hp), lambda i: (0, 0)),
                  pl.BlockSpec((w * c, wo * c), lambda i: (0, 0)),
                  pl.BlockSpec((None, hp, w * c), lambda i: (i, 0, 0))],
        out_specs=pl.BlockSpec((None, ho, wo * c), lambda i: (i, 0, 0)),
        compiler_params=pltpu.CompilerParams(
            dimension_semantics=("parallel",),
            vmem_limit_bytes=_VMEM_LIMIT),
    )(ph, pw, xr)
    return out.reshape(bsz, ho, wo, c)


def blend(a, b, alpha, out_dtype=jnp.bfloat16):
    """(1 - alpha) * a + alpha * b; alpha is a traced device scalar (no retrace)."""
    shape = a.shape
    m = int(np.prod(shape[:-1]))
    c = int(shape[-1])
    a2 = a.astype(jnp.bfloat16).reshape(m, c)
    b2 = b.astype(jnp.bfloat16).reshape(m, c)
    al = jnp.asarray(alpha, jnp.float32).reshape(1, 1)
    mp, tm = _choose_m_tiling(m)
    if mp != m:
        a2 = jnp.pad(a2, ((0, mp - m), (0, 0)))
        b2 = jnp.pad(b2, ((0, mp - m), (0, 0)))
    out = pl.pallas_call(
        _blend_kernel,
        out_shape=jax.ShapeDtypeStruct((mp, c), out_dtype),
        grid=(mp // tm,),
        in_specs=[pl.BlockSpec((1, 1), lambda i: (0, 0)),
                  pl.BlockSpec((tm, c), lambda i: (i, 0)),
                  pl.BlockSpec((tm, c), lambda i: (i, 0))],
        out_specs=pl.BlockSpec((tm, c), lambda i: (i, 0)),
        compiler_params=pltpu.CompilerParams(
            dimension_semantics=("parallel",),
            vmem_limit_bytes=_VMEM_LIMIT),
    )(al, a2, b2)
    out = out[:m] if mp != m else out
    return out.reshape(shape)


def minibatch_std_nhwc(x):
    # TODO(synk): MiniBatchStd source not provided; standard PGGAN version assumed.
    # Tiny cross-batch reduction on a (B,3,3,256) tensor -> plain JAX glue.
    xf = x.astype(jnp.float32)
    std = jnp.std(xf, axis=0, ddof=1)            # unbiased, matches torch.std default
    feat = jnp.full(x.shape[:-1] + (1,), jnp.mean(std), x.dtype)
    return jnp.concatenate([x, feat], axis=-1)


# ----------------------------------------------------------------------------
# Parameters: deterministic synthetic init + one-time repack / pad / bf16 cast
# ----------------------------------------------------------------------------
def _conv_init(key, cout, cin, kh, kw):
    kw_, kb_ = jax.random.split(key)
    fan_in = cin * kh * kw
    w = jax.random.normal(kw_, (cout, cin, kh, kw), jnp.float32) / np.sqrt(fan_in)
    b = 0.01 * jax.random.normal(kb_, (cout,), jnp.float32)
    return w, b


def _prep_conv3x3(w, b):
    cout, cin = int(w.shape[0]), int(w.shape[1])
    wt = jnp.transpose(w, (2, 3, 1, 0)).reshape(9, cin, cout)   # taps-major
    kp, npad = _round_up(cin, 8), _round_up(cout, 8)
    wt = jnp.pad(wt, ((0, 0), (0, kp - cin), (0, npad - cout)))
    bias = jnp.pad(b, (0, npad - cout)).reshape(1, npad).astype(jnp.float32)
    return {"w": wt.astype(jnp.bfloat16), "b": bias, "cout": cout}


def _prep_conv1x1(w, b):
    cout, cin = int(w.shape[0]), int(w.shape[1])
    w2 = jnp.transpose(w.reshape(cout, cin), (1, 0))            # (Cin, Cout)
    kp, npad = _round_up(cin, 8), _round_up(cout, 8)
    w2 = jnp.pad(w2, ((0, kp - cin), (0, npad - cout)))
    bias = jnp.pad(b, (0, npad - cout)).reshape(1, npad).astype(jnp.float32)
    return {"w": w2.astype(jnp.bfloat16), "b": bias, "cout": cout}


def _prep_conv_full(w, b):
    # full-window conv (padding 0, output 1x1): flatten (dy, dx, c) to K.
    cout, cin, kh, kw = (int(s) for s in w.shape)
    w2 = jnp.transpose(w, (2, 3, 1, 0)).reshape(kh * kw * cin, cout)
    bias = b.reshape(1, cout).astype(jnp.float32)
    return {"w": w2.astype(jnp.bfloat16), "b": bias, "cout": cout}


def init_discriminator(key, channel):
    params = {"convertCH": [], "blocks": []}
    for i in range(6):
        key, k0 = jax.random.split(key)
        params["convertCH"].append(_prep_conv1x1(*_conv_init(k0, INCHS[i], channel, 1, 1)))
        inch, outch = INCHS[i], OUTCHS[i]
        if FINALS[i]:
            key, k1, k2, k3 = jax.random.split(key, 4)
            blk = {"conv1": _prep_conv3x3(*_conv_init(k1, outch, inch + 1, 3, 3)),
                   "conv2": _prep_conv_full(*_conv_init(k2, outch, outch,
                                                        SIZES[i][0], SIZES[i][1])),
                   "conv3": _prep_conv1x1(*_conv_init(k3, 1, outch, 1, 1))}
        else:
            key, k1, k2 = jax.random.split(key, 3)
            blk = {"conv1": _prep_conv3x3(*_conv_init(k1, outch, inch, 3, 3)),
                   "conv2": _prep_conv3x3(*_conv_init(k2, outch, outch, 3, 3))}
        params["blocks"].append(blk)
    return params


# ----------------------------------------------------------------------------
# Forward pass (mirrors Discriminator.forward)
# ----------------------------------------------------------------------------
def conv_module_d(x, blk, final, size):
    if final:
        x = minibatch_std_nhwc(x)
        x = conv3x3_same(x, blk["conv1"], negative_slope=0.2)
        bsz, h, w, c = x.shape                       # full-window conv -> 1x1 spatial
        y = matmul_bias_act(x.reshape(bsz, h * w * c), blk["conv2"]["w"],
                            blk["conv2"]["b"], negative_slope=0.2)
        y = y.reshape(bsz, 1, 1, blk["conv2"]["cout"])
        return conv1x1(y, blk["conv3"], negative_slope=None)
    x = conv3x3_same(x, blk["conv1"], negative_slope=0.2)
    x = conv3x3_same(x, blk["conv2"], negative_slope=0.2)
    return adaptive_avg_pool_nhwc(x, (size[0] // 2, size[1] // 2))


def discriminator_forward(params, x_nchw, res):
    nblk = len(params["blocks"])
    res = min(res, nblk)
    eps = 1e-07
    n = max(int(res - eps), 0)

    # NCHW -> NHWC once; pad input channels to a multiple of 8 (zero weight rows
    # in the pre-padded convertCH weights make this a no-op numerically).
    x = jnp.transpose(x_nchw, (0, 2, 3, 1)).astype(jnp.bfloat16)
    c = x.shape[-1]
    cpad = _round_up(c, 8)
    if cpad != c:
        x = jnp.pad(x, ((0, 0), (0, 0), (0, 0), (0, cpad - c)))

    x_big = conv1x1(x, params["convertCH"][n])
    x_big = conv_module_d(x_big, params["blocks"][n], FINALS[n], SIZES[n])
    if n == 0:
        out = x_big
    else:
        x_sml = adaptive_avg_pool_nhwc(x, x_big.shape[1:3])
        x_sml = conv1x1(x_sml, params["convertCH"][n - 1])
        alpha = res - int(res - eps)
        out = blend(x_sml, x_big, alpha)
    for i in range(n):
        j = n - 1 - i
        out = conv_module_d(out, params["blocks"][j], FINALS[j], SIZES[j])
    return jnp.squeeze(out.astype(jnp.float32))


if __name__ == "__main__":
    key = jax.random.PRNGKey(0)
    key, kp, kx = jax.random.split(key, 3)
    channel = 3
    params = init_discriminator(kp, channel)

    res = 2.5                     # n=2: exercises fade-in blend, even + uneven pools,
    B = 2                         # two non-final blocks and the final MiniBatchStd block
    H = W = SIZES[2][0]           # 14x14 input at this resolution stage
    x = jax.random.normal(kx, (B, channel, H, W), jnp.float32)

    y = discriminator_forward(params, x, res)
    y = jax.block_until_ready(y)
    assert y.shape == (B,), y.shape
    assert np.all(np.isfinite(np.asarray(y)))
    print("KERNEL_OK")
</pallas_src>

<mosaic_0001>
module attributes {stable_mosaic.version = 11 : i64} {
  func.func @_mm_bias_act_kernel(%arg0: i32, %arg1: memref<392x8xbf16, #tpu.memory_space<vmem>>, %arg2: memref<8x64xbf16, #tpu.memory_space<vmem>>, %arg3: memref<1x64xf32, #tpu.memory_space<vmem>>, %arg4: memref<392x64xbf16, #tpu.memory_space<vmem>>) attributes {dimension_semantics = [#tpu.dimension_semantics<parallel>], iteration_bounds = array<i64: 1>, scalar_prefetch = 0 : i64, scratch_operands = 0 : i64, tpu.core_type = #tpu.core_type<tc>, window_params = [{transform_indices = @transform_0, window_bounds = array<i64: 392, 8>}, {pipeline_mode = #tpu.pipeline_mode<synchronous>, transform_indices = @transform_1, window_bounds = array<i64: 8, 64>}, {pipeline_mode = #tpu.pipeline_mode<synchronous>, transform_indices = @transform_2, window_bounds = array<i64: 1, 64>}, {transform_indices = @transform_3, window_bounds = array<i64: 392, 64>}]} {
    %c0 = arith.constant 0 : index
    %c0_0 = arith.constant 0 : index
    %0 = vector.load %arg1[%c0, %c0_0] : memref<392x8xbf16, #tpu.memory_space<vmem>>, vector<392x8xbf16>
    %c0_1 = arith.constant 0 : index
    %c0_2 = arith.constant 0 : index
    %1 = vector.load %arg2[%c0_1, %c0_2] : memref<8x64xbf16, #tpu.memory_space<vmem>>, vector<8x64xbf16>
    %cst = arith.constant dense<0.000000e+00> : vector<392x64xf32>
    %2 = tpu.matmul %0, %1, %cst {dimension_numbers = #tpu.dot_dimension_numbers<[1], [0], [0], [1], [0, 0, 1, 1], [], []>} : vector<392x8xbf16>, vector<8x64xbf16>, vector<392x64xf32> -> vector<392x64xf32>
    %c0_3 = arith.constant 0 : index
    %c0_4 = arith.constant 0 : index
    %3 = vector.load %arg3[%c0_3, %c0_4] : memref<1x64xf32, #tpu.memory_space<vmem>>, vector<1x64xf32>
    %4 = vector.broadcast %3 : vector<1x64xf32> to vector<392x64xf32>
    %5 = arith.addf %2, %4 : vector<392x64xf32>
    %6 = arith.truncf %5 : vector<392x64xf32> to vector<392x64xbf16>
    %c0_5 = arith.constant 0 : index
    %c0_6 = arith.constant 0 : index
    %7 = vector.load %arg4[%c0_5, %c0_6] : memref<392x64xbf16, #tpu.memory_space<vmem>>, vector<392x64xbf16>
    tpu.vector_store %arg4[%c0_5, %c0_6], %6 {strides = array<i32>} : memref<392x64xbf16, #tpu.memory_space<vmem>>, vector<392x64xbf16>,
    return
  }
  func.func @transform_0(%arg0: i32) -> (i32, i32) {
    %c0_i32 = arith.constant 0 : i32
    %c0_i32_0 = arith.constant 0 : i32
    return %arg0, %c0_i32 : i32, i32
  }
  func.func @transform_1(%arg0: i32) -> (i32, i32) {
    %c0_i32 = arith.constant 0 : i32
    %c0_i32_0 = arith.constant 0 : i32
    %c0_i32_1 = arith.constant 0 : i32
    return %c0_i32, %c0_i32_0 : i32, i32
  }
  func.func @transform_2(%arg0: i32) -> (i32, i32) {
    %c0_i32 = arith.constant 0 : i32
    %c0_i32_0 = arith.constant 0 : i32
    %c0_i32_1 = arith.constant 0 : i32
    return %c0_i32, %c0_i32_0 : i32, i32
  }
  func.func @transform_3(%arg0: i32) -> (i32, i32) {
    %c0_i32 = arith.constant 0 : i32
    %c0_i32_0 = arith.constant 0 : i32
    return %arg0, %c0_i32 : i32, i32
  }
}

</mosaic_0001>

<llo_original>
// kernel: tpu_custom_call.1
$region0: #{tpu_custom_call.1}
  #allocation0 [shape = 'u32[]', space=smem, size = 0x4, offset = 0x4, fixed_abs, tag = 'smem constant byte address 0x4 - core index']
  #allocation1 [shape = 'u32[72,128]{1,0:T(1,128)}', space=vmem, size = 0x9000, scoped, tag = 'internal scratch']
  %s0 = inlined_call_operand.vmem [shape: bf16[392,8], index: 0, kind: input, shape index: {}]
  %s1 = inlined_call_operand.vmem [shape: bf16[8,64], index: 1, kind: input, shape index: {}]
  %s2 = inlined_call_operand.vmem [shape: f32[1,64], index: 2, kind: input, shape index: {}]
  %s3 = inlined_call_operand.vmem [shape: bf16[392,64], index: 3, kind: output, shape index: {}]
  %s4 = sld [smem:[#allocation0]]
  $region22: #{tpu_custom_call.1} parent=0
    _
  %s6 = ssub.s32 1, %s4
  %s7 = scalar_select 0, %s6, %s4
  // Predicated region
  $region2: #{tpu_custom_call.1} parent=0 // pred_check
    _
  $region3: #{tpu_custom_call.1} parent=0 // pred_check_branch
    %9 = sbr.rel (0) target = $region5
  $region4: #{tpu_custom_call.1} parent=0 // pred_region
    _
  $region5: #{tpu_custom_call.1} parent=0 // pred_fallthru
    _
  // Predicated region
  $region6: #{tpu_custom_call.1} parent=0 // pred_check
    _
  $region7: #{tpu_custom_call.1} parent=0 // pred_check_branch
    %11 = sbr.rel (0) target = $region9
  $region8: #{tpu_custom_call.1} parent=0 // pred_region
    _
  $region9: #{tpu_custom_call.1} parent=0 // pred_fallthru
    _
  // Predicated region
  $region10: #{tpu_custom_call.1} parent=0 // pred_check
    _
  $region11: #{tpu_custom_call.1} parent=0 // pred_check_branch
    %13 = sbr.rel (0) target = $region13
  $region12: #{tpu_custom_call.1} parent=0 // pred_region
    _
  $region13: #{tpu_custom_call.1} parent=0 // pred_fallthru
    _
  %v15 = vld [vmem:[%s0] sm:$0xf]
  %v16 = vld [vmem:[%s0 + $0x4] sm:$0xf]
  %v17 = vld [vmem:[%s0 + $0x8] sm:$0xf]
  %v18 = vld [vmem:[%s0 + $0xc] sm:$0xf]
  %v19 = vld [vmem:[%s0 + $0x10] sm:$0xf]
  %v20 = vld [vmem:[%s0 + $0x14] sm:$0xf]
  %v21 = vld [vmem:[%s0 + $0x18] sm:$0xf]
  %v22 = vld [vmem:[%s0 + $0x1c] sm:$0xf]
  %v23 = vld [vmem:[%s0 + $0x20] sm:$0xf]
  %v24 = vld [vmem:[%s0 + $0x24] sm:$0xf]
  %v25 = vld [vmem:[%s0 + $0x28] sm:$0xf]
  %v26 = vld [vmem:[%s0 + $0x2c] sm:$0xf]
  %v27 = vld [vmem:[%s0 + $0x30] sm:$0xf]
  %v28 = vld [vmem:[%s0 + $0x34] sm:$0xf]
  %v29 = vld [vmem:[%s0 + $0x38] sm:$0xf]
  %v30 = vld [vmem:[%s0 + $0x3c] sm:$0xf]
  %v31 = vld [vmem:[%s0 + $0x40] sm:$0xf]
  %v32 = vld [vmem:[%s0 + $0x44] sm:$0xf]
  %v33 = vld [vmem:[%s0 + $0x48] sm:$0xf]
  %v34 = vld [vmem:[%s0 + $0x4c] sm:$0xf]
  %v35 = vld [vmem:[%s0 + $0x50] sm:$0xf]
  %v36 = vld [vmem:[%s0 + $0x54] sm:$0xf]
  %v37 = vld [vmem:[%s0 + $0x58] sm:$0xf]
  %v38 = vld [vmem:[%s0 + $0x5c] sm:$0xf]
  %v39 = vld [vmem:[%s0 + $0x60] sm:$0xf]
  %v40 = vld [vmem:[%s0 + $0x64] sm:$0xf]
  %v41 = vld [vmem:[%s0 + $0x68] sm:$0xf]
  %v42 = vld [vmem:[%s0 + $0x6c] sm:$0xf]
  %v43 = vld [vmem:[%s0 + $0x70] sm:$0xf]
  %v44 = vld [vmem:[%s0 + $0x74] sm:$0xf]
  %v45 = vld [vmem:[%s0 + $0x78] sm:$0xf]
  %v46 = vld [vmem:[%s0 + $0x7c] sm:$0xf]
  %v47 = vld [vmem:[%s0 + $0x80] sm:$0xf]
  %v48 = vld [vmem:[%s0 + $0x84] sm:$0xf]
  %v49 = vld [vmem:[%s0 + $0x88] sm:$0xf]
  %v50 = vld [vmem:[%s0 + $0x8c] sm:$0xf]
  %v51 = vld [vmem:[%s0 + $0x90] sm:$0xf]
  %v52 = vld [vmem:[%s0 + $0x94] sm:$0xf]
  %v53 = vld [vmem:[%s0 + $0x98] sm:$0xf]
  %v54 = vld [vmem:[%s0 + $0x9c] sm:$0xf]
  %v55 = vld [vmem:[%s0 + $0xa0] sm:$0xf]
  %v56 = vld [vmem:[%s0 + $0xa4] sm:$0xf]
  %v57 = vld [vmem:[%s0 + $0xa8] sm:$0xf]
  %v58 = vld [vmem:[%s0 + $0xac] sm:$0xf]
  %v59 = vld [vmem:[%s0 + $0xb0] sm:$0xf]
  %v60 = vld [vmem:[%s0 + $0xb4] sm:$0xf]
  %v61 = vld [vmem:[%s0 + $0xb8] sm:$0xf]
  %v62 = vld [vmem:[%s0 + $0xbc] sm:$0xf]
  %v63 = vld [vmem:[%s0 + $0xc0] sm:$0xf]
  %v64 = vld [vmem:[%s1] sm:$0xf]
  %v65 = vld [vmem:[%s2] sm:$0x1]
  %v67 = vperm.slane %v65, 0
  %v118 = vunpack.c.l.b16 %v15
  %v119 = vunpack.c.l.b16 %v16
  %v120 = vunpack.c.l.b16 %v17
  %v121 = vunpack.c.l.b16 %v18
  %v122 = vunpack.c.l.b16 %v19
  %v123 = vunpack.c.l.b16 %v20
  %v124 = vunpack.c.l.b16 %v21
  %v125 = vunpack.c.l.b16 %v22
  %v126 = vunpack.c.l.b16 %v23
  %v127 = vunpack.c.l.b16 %v24
  %v128 = vunpack.c.l.b16 %v25
  %v129 = vunpack.c.l.b16 %v26
  %v130 = vunpack.c.l.b16 %v27
  %v131 = vunpack.c.l.b16 %v28
  %v132 = vunpack.c.l.b16 %v29
  %v133 = vunpack.c.l.b16 %v30
  %v134 = vunpack.c.l.b16 %v31
  %v135 = vunpack.c.l.b16 %v32
  %v136 = vunpack.c.l.b16 %v33
  %v137 = vunpack.c.l.b16 %v34
  %v138 = vunpack.c.l.b16 %v35
  %v139 = vunpack.c.l.b16 %v36
  %v140 = vunpack.c.l.b16 %v37
  %v141 = vunpack.c.l.b16 %v38
  %v142 = vunpack.c.l.b16 %v39
  %v143 = vunpack.c.l.b16 %v40
  %v144 = vunpack.c.l.b16 %v41
  %v145 = vunpack.c.l.b16 %v42
  %v146 = vunpack.c.l.b16 %v43
  %v147 = vunpack.c.l.b16 %v44
  %v148 = vunpack.c.l.b16 %v45
  %v149 = vunpack.c.l.b16 %v46
  %v150 = vunpack.c.l.b16 %v47
  %v151 = vunpack.c.l.b16 %v48
  %v152 = vunpack.c.l.b16 %v49
  %v153 = vunpack.c.l.b16 %v50
  %v154 = vunpack.c.l.b16 %v51
  %v155 = vunpack.c.l.b16 %v52
  %v156 = vunpack.c.l.b16 %v53
  %v157 = vunpack.c.l.b16 %v54
  %v158 = vunpack.c.l.b16 %v55
  %v159 = vunpack.c.l.b16 %v56
  %v160 = vunpack.c.l.b16 %v57
  %v161 = vunpack.c.l.b16 %v58
  %v162 = vunpack.c.l.b16 %v59
  %v163 = vunpack.c.l.b16 %v60
  %v164 = vunpack.c.l.b16 %v61
  %v165 = vunpack.c.l.b16 %v62
  %v166 = vunpack.c.l.b16 %v63
  %v167 = vpack.c.b16 %v119, %v118
  %v168 = vpack.c.b16 %v121, %v120
  %v169 = vpack.c.b16 %v123, %v122
  %v170 = vpack.c.b16 %v125, %v124
  %v171 = vpack.c.b16 %v127, %v126
  %v172 = vpack.c.b16 %v129, %v128
  %v173 = vpack.c.b16 %v131, %v130
  %v174 = vpack.c.b16 %v133, %v132
  %v175 = vpack.c.b16 %v135, %v134
  %v176 = vpack.c.b16 %v137, %v136
  %v177 = vpack.c.b16 %v139, %v138
  %v178 = vpack.c.b16 %v141, %v140
  %v179 = vpack.c.b16 %v143, %v142
  %v180 = vpack.c.b16 %v145, %v144
  %v181 = vpack.c.b16 %v147, %v146
  %v182 = vpack.c.b16 %v149, %v148
  %v183 = vpack.c.b16 %v151, %v150
  %v184 = vpack.c.b16 %v153, %v152
  %v185 = vpack.c.b16 %v155, %v154
  %v186 = vpack.c.b16 %v157, %v156
  %v187 = vpack.c.b16 %v159, %v158
  %v188 = vpack.c.b16 %v161, %v160
  %v189 = vpack.c.b16 %v163, %v162
  %v190 = vpack.c.b16 %v165, %v164
  %v191 = vpack.c.b16 %v166, %v166
  %vm192 = vcmask 64512
  %v194 = vsel %vm192, %v167, 0
  %v197 = vsel %vm192, %v168, 0
  %v200 = vsel %vm192, %v169, 0
  %v203 = vsel %vm192, %v170, 0
  %v206 = vsel %vm192, %v171, 0
  %v209 = vsel %vm192, %v172, 0
  %v212 = vsel %vm192, %v173, 0
  %v215 = vsel %vm192, %v174, 0
  %v218 = vsel %vm192, %v175, 0
  %v221 = vsel %vm192, %v176, 0
  %v224 = vsel %vm192, %v177, 0
  %v227 = vsel %vm192, %v178, 0
  %v230 = vsel %vm192, %v179, 0
  %v233 = vsel %vm192, %v180, 0
  %v236 = vsel %vm192, %v181, 0
  %v239 = vsel %vm192, %v182, 0
  %v242 = vsel %vm192, %v183, 0
  %v245 = vsel %vm192, %v184, 0
  %v248 = vsel %vm192, %v185, 0
  %v251 = vsel %vm192, %v186, 0
  %v254 = vsel %vm192, %v187, 0
  %v257 = vsel %vm192, %v188, 0
  %v260 = vsel %vm192, %v189, 0
  %v263 = vsel %vm192, %v190, 0
  %v266 = vsel %vm192, %v191, 0
  %vm268 = vcmask 1043456
  %v270 = vsel %vm268, %v64, 0
  %272 = vmatpush.bf16.msra.mxu0 0
  %273 = vmatpush.bf16.msra.mxu0 0
  %274 = vmatpush.bf16.msra.mxu0 0
  %275 = vmatpush.bf16.msra.mxu0 0
  %276 = vmatpush.bf16.msra.mxu0 0
  %277 = vmatpush.bf16.msra.mxu0 0
  %278 = vmatpush.bf16.msra.mxu0 0
  %279 = vmatpush.bf16.msra.mxu0 %v270
  %280 = vmatmul.bf16.gmra.mxu0 %v194
  %v281 = vpop.f32.mrf.mxu0
  %v282 = vadd.f32 %v67, %v281
  %v283 = vpop.f32.mrf.mxu0
  %v284 = vadd.f32 %v67, %v283
  %285 = vmatmul.bf16.gmra.mxu0 %v197
  %v286 = vpop.f32.mrf.mxu0
  %v287 = vadd.f32 %v67, %v286
  %v288 = vpop.f32.mrf.mxu0
  %v289 = vadd.f32 %v67, %v288
  %290 = vmatmul.bf16.gmra.mxu0 %v200
  %v291 = vpop.f32.mrf.mxu0
  %v292 = vadd.f32 %v67, %v291
  %v293 = vpop.f32.mrf.mxu0
  %v294 = vadd.f32 %v67, %v293
  %295 = vmatmul.bf16.gmra.mxu0 %v203
  %v296 = vpop.f32.mrf.mxu0
  %v297 = vadd.f32 %v67, %v296
  %v298 = vpop.f32.mrf.mxu0
  %v299 = vadd.f32 %v67, %v298
  %300 = vmatmul.bf16.gmra.mxu0 %v206
  %v301 = vpop.f32.mrf.mxu0
  %v302 = vadd.f32 %v67, %v301
  %v303 = vpop.f32.mrf.mxu0
  %v304 = vadd.f32 %v67, %v303
  %305 = vmatmul.bf16.gmra.mxu0 %v209
  %v306 = vpop.f32.mrf.mxu0
  %v307 = vadd.f32 %v67, %v306
  %v308 = vpop.f32.mrf.mxu0
  %v309 = vadd.f32 %v67, %v308
  %310 = vmatmul.bf16.gmra.mxu0 %v212
  %v311 = vpop.f32.mrf.mxu0
  %v312 = vadd.f32 %v67, %v311
  %v313 = vpop.f32.mrf.mxu0
  %v314 = vadd.f32 %v67, %v313
  %315 = vmatmul.bf16.gmra.mxu0 %v215
  %v316 = vpop.f32.mrf.mxu0
  %v317 = vadd.f32 %v67, %v316
  %v318 = vpop.f32.mrf.mxu0
  %v319 = vadd.f32 %v67, %v318
  %320 = vmatmul.bf16.gmra.mxu0 %v218
  %v321 = vpop.f32.mrf.mxu0
  %v322 = vadd.f32 %v67, %v321
  %v323 = vpop.f32.mrf.mxu0
  %v324 = vadd.f32 %v67, %v323
  %325 = vmatmul.bf16.gmra.mxu0 %v221
  %v326 = vpop.f32.mrf.mxu0
  %v327 = vadd.f32 %v67, %v326
  %v328 = vpop.f32.mrf.mxu0
  %v329 = vadd.f32 %v67, %v328
  %330 = vmatmul.bf16.gmra.mxu0 %v224
  %v331 = vpop.f32.mrf.mxu0
  %v332 = vadd.f32 %v67, %v331
  %v333 = vpop.f32.mrf.mxu0
  %v334 = vadd.f32 %v67, %v333
  %335 = vmatmul.bf16.gmra.mxu0 %v227
  %v336 = vpop.f32.mrf.mxu0
  %v337 = vadd.f32 %v67, %v336
  %v338 = vpop.f32.mrf.mxu0
  %v339 = vadd.f32 %v67, %v338
  %340 = vmatmul.bf16.gmra.mxu0 %v230
  %v341 = vpop.f32.mrf.mxu0
  %v342 = vadd.f32 %v67, %v341
  %v343 = vpop.f32.mrf.mxu0
  %v344 = vadd.f32 %v67, %v343
  %345 = vmatmul.bf16.gmra.mxu0 %v233
  %v346 = vpop.f32.mrf.mxu0
  %v347 = vadd.f32 %v67, %v346
  %v348 = vpop.f32.mrf.mxu0
  %v349 = vadd.f32 %v67, %v348
  %350 = vmatmul.bf16.gmra.mxu0 %v236
  %v351 = vpop.f32.mrf.mxu0
  %v352 = vadd.f32 %v67, %v351
  %v353 = vpop.f32.mrf.mxu0
  %v354 = vadd.f32 %v67, %v353
  %355 = vmatmul.bf16.gmra.mxu0 %v239
  %v356 = vpop.f32.mrf.mxu0
  %v357 = vadd.f32 %v67, %v356
  %v358 = vpop.f32.mrf.mxu0
  %v359 = vadd.f32 %v67, %v358
  %360 = vmatmul.bf16.gmra.mxu0 %v242
  %v361 = vpop.f32.mrf.mxu0
  %v362 = vadd.f32 %v67, %v361
  %v363 = vpop.f32.mrf.mxu0
  %v364 = vadd.f32 %v67, %v363
  %365 = vmatmul.bf16.gmra.mxu0 %v245
  %v366 = vpop.f32.mrf.mxu0
  %v367 = vadd.f32 %v67, %v366
  %v368 = vpop.f32.mrf.mxu0
  %v369 = vadd.f32 %v67, %v368
  %370 = vmatmul.bf16.gmra.mxu0 %v248
  %v371 = vpop.f32.mrf.mxu0
  %v372 = vadd.f32 %v67, %v371
  %v373 = vpop.f32.mrf.mxu0
  %v374 = vadd.f32 %v67, %v373
  %375 = vmatmul.bf16.gmra.mxu0 %v251
  %v376 = vpop.f32.mrf.mxu0
  %v377 = vadd.f32 %v67, %v376
  %v378 = vpop.f32.mrf.mxu0
  %v379 = vadd.f32 %v67, %v378
  %380 = vmatmul.bf16.gmra.mxu0 %v254
  %v381 = vpop.f32.mrf.mxu0
  %v382 = vadd.f32 %v67, %v381
  %v383 = vpop.f32.mrf.mxu0
  %v384 = vadd.f32 %v67, %v383
  %385 = vmatmul.bf16.gmra.mxu0 %v257
  %v386 = vpop.f32.mrf.mxu0
  %v387 = vadd.f32 %v67, %v386
  %v388 = vpop.f32.mrf.mxu0
  %v389 = vadd.f32 %v67, %v388
  %390 = vmatmul.bf16.gmra.mxu0 %v260
  %v391 = vpop.f32.mrf.mxu0
  %v392 = vadd.f32 %v67, %v391
  %v393 = vpop.f32.mrf.mxu0
  %v394 = vadd.f32 %v67, %v393
  %395 = vmatmul.bf16.gmra.mxu0 %v263
  %v396 = vpop.f32.mrf.mxu0
  %v397 = vadd.f32 %v67, %v396
  %v398 = vpop.f32.mrf.mxu0
  %v399 = vadd.f32 %v67, %v398
  %400 = vmatmul.bf16.gmra.mxu0 %v266
  %v401 = vpop.f32.mrf.mxu0
  %v402 = vadd.f32 %v67, %v401
  %v403 = vpop.f32.mrf.mxu0
  %404 = vdwg.mxu0
  %v405 = vpack.c.bf16 %v282, %v282
  %v406 = vpack.c.bf16 %v284, %v284
  %v407 = vpack.c.bf16 %v287, %v287
  %v408 = vpack.c.bf16 %v289, %v289
  %v409 = vpack.c.bf16 %v292, %v292
  %v410 = vpack.c.bf16 %v294, %v294
  %v411 = vpack.c.bf16 %v297, %v297
  %v412 = vpack.c.bf16 %v299, %v299
  %v413 = vpack.c.bf16 %v302, %v302
  %v414 = vpack.c.bf16 %v304, %v304
  %v415 = vpack.c.bf16 %v307, %v307
  %v416 = vpack.c.bf16 %v309, %v309
  %v417 = vpack.c.bf16 %v312, %v312
  %v418 = vpack.c.bf16 %v314, %v314
  %v419 = vpack.c.bf16 %v317, %v317
  %v420 = vpack.c.bf16 %v319, %v319
  %v421 = vpack.c.bf16 %v322, %v322
  %v422 = vpack.c.bf16 %v324, %v324
  %v423 = vpack.c.bf16 %v327, %v327
  %v424 = vpack.c.bf16 %v329, %v329
  %v425 = vpack.c.bf16 %v332, %v332
  %v426 = vpack.c.bf16 %v334, %v334
  %v427 = vpack.c.bf16 %v337, %v337
  %v428 = vpack.c.bf16 %v339, %v339
  %v429 = vpack.c.bf16 %v342, %v342
  %v430 = vpack.c.bf16 %v344, %v344
  %v431 = vpack.c.bf16 %v347, %v347
  %v432 = vpack.c.bf16 %v349, %v349
  %v433 = vpack.c.bf16 %v352, %v352
  %v434 = vpack.c.bf16 %v354, %v354
  %v435 = vpack.c.bf16 %v357, %v357
  %v436 = vpack.c.bf16 %v359, %v359
  %v437 = vpack.c.bf16 %v362, %v362
  %v438 = vpack.c.bf16 %v364, %v364
  %v439 = vpack.c.bf16 %v367, %v367
  %v440 = vpack.c.bf16 %v369, %v369
  %v441 = vpack.c.bf16 %v372, %v372
  %v442 = vpack.c.bf16 %v374, %v374
  %v443 = vpack.c.bf16 %v377, %v377
  %v444 = vpack.c.bf16 %v379, %v379
  %v445 = vpack.c.bf16 %v382, %v382
  %v446 = vpack.c.bf16 %v384, %v384
  %v447 = vpack.c.bf16 %v387, %v387
  %v448 = vpack.c.bf16 %v389, %v389
  %v449 = vpack.c.bf16 %v392, %v392
  %v450 = vpack.c.bf16 %v394, %v394
  %v451 = vpack.c.bf16 %v397, %v397
  %v452 = vpack.c.bf16 %v399, %v399
  %v453 = vpack.c.bf16 %v402, %v402
  %vm454 = vcmask 519168
  %455 = vst.msk [vmem:[%s3] sm:$0xf] %vm454, %v405
  %456 = vst.msk [vmem:[%s3 + $0x4] sm:$0xf] %vm454, %v406
  %457 = vst.msk [vmem:[%s3 + $0x8] sm:$0xf] %vm454, %v407
  %458 = vst.msk [vmem:[%s3 + $0xc] sm:$0xf] %vm454, %v408
  %459 = vst.msk [vmem:[%s3 + $0x10] sm:$0xf] %vm454, %v409
  %460 = vst.msk [vmem:[%s3 + $0x14] sm:$0xf] %vm454, %v410
  %461 = vst.msk [vmem:[%s3 + $0x18] sm:$0xf] %vm454, %v411
  %462 = vst.msk [vmem:[%s3 + $0x1c] sm:$0xf] %vm454, %v412
  %463 = vst.msk [vmem:[%s3 + $0x20] sm:$0xf] %vm454, %v413
  %464 = vst.msk [vmem:[%s3 + $0x24] sm:$0xf] %vm454, %v414
  %465 = vst.msk [vmem:[%s3 + $0x28] sm:$0xf] %vm454, %v415
  %466 = vst.msk [vmem:[%s3 + $0x2c] sm:$0xf] %vm454, %v416
  %467 = vst.msk [vmem:[%s3 + $0x30] sm:$0xf] %vm454, %v417
  %468 = vst.msk [vmem:[%s3 + $0x34] sm:$0xf] %vm454, %v418
  %469 = vst.msk [vmem:[%s3 + $0x38] sm:$0xf] %vm454, %v419
  %470 = vst.msk [vmem:[%s3 + $0x3c] sm:$0xf] %vm454, %v420
  %471 = vst.msk [vmem:[%s3 + $0x40] sm:$0xf] %vm454, %v421
  %472 = vst.msk [vmem:[%s3 + $0x44] sm:$0xf] %vm454, %v422
  %473 = vst.msk [vmem:[%s3 + $0x48] sm:$0xf] %vm454, %v423
  %474 = vst.msk [vmem:[%s3 + $0x4c] sm:$0xf] %vm454, %v424
  %475 = vst.msk [vmem:[%s3 + $0x50] sm:$0xf] %vm454, %v425
  %476 = vst.msk [vmem:[%s3 + $0x54] sm:$0xf] %vm454, %v426
  %477 = vst.msk [vmem:[%s3 + $0x58] sm:$0xf] %vm454, %v427
  %478 = vst.msk [vmem:[%s3 + $0x5c] sm:$0xf] %vm454, %v428
  %479 = vst.msk [vmem:[%s3 + $0x60] sm:$0xf] %vm454, %v429
  %480 = vst.msk [vmem:[%s3 + $0x64] sm:$0xf] %vm454, %v430
  %481 = vst.msk [vmem:[%s3 + $0x68] sm:$0xf] %vm454, %v431
  %482 = vst.msk [vmem:[%s3 + $0x6c] sm:$0xf] %vm454, %v432
  %483 = vst.msk [vmem:[%s3 + $0x70] sm:$0xf] %vm454, %v433
  %484 = vst.msk [vmem:[%s3 + $0x74] sm:$0xf] %vm454, %v434
  %485 = vst.msk [vmem:[%s3 + $0x78] sm:$0xf] %vm454, %v435
  %486 = vst.msk [vmem:[%s3 + $0x7c] sm:$0xf] %vm454, %v436
  %487 = vst.msk [vmem:[%s3 + $0x80] sm:$0xf] %vm454, %v437
  %488 = vst.msk [vmem:[%s3 + $0x84] sm:$0xf] %vm454, %v438
  %489 = vst.msk [vmem:[%s3 + $0x88] sm:$0xf] %vm454, %v439
  %490 = vst.msk [vmem:[%s3 + $0x8c] sm:$0xf] %vm454, %v440
  %491 = vst.msk [vmem:[%s3 + $0x90] sm:$0xf] %vm454, %v441
  %492 = vst.msk [vmem:[%s3 + $0x94] sm:$0xf] %vm454, %v442
  %493 = vst.msk [vmem:[%s3 + $0x98] sm:$0xf] %vm454, %v443
  %494 = vst.msk [vmem:[%s3 + $0x9c] sm:$0xf] %vm454, %v444
  %495 = vst.msk [vmem:[%s3 + $0xa0] sm:$0xf] %vm454, %v445
  %496 = vst.msk [vmem:[%s3 + $0xa4] sm:$0xf] %vm454, %v446
  %497 = vst.msk [vmem:[%s3 + $0xa8] sm:$0xf] %vm454, %v447
  %498 = vst.msk [vmem:[%s3 + $0xac] sm:$0xf] %vm454, %v448
  %499 = vst.msk [vmem:[%s3 + $0xb0] sm:$0xf] %vm454, %v449
  %500 = vst.msk [vmem:[%s3 + $0xb4] sm:$0xf] %vm454, %v450
  %501 = vst.msk [vmem:[%s3 + $0xb8] sm:$0xf] %vm454, %v451
  %502 = vst.msk [vmem:[%s3 + $0xbc] sm:$0xf] %vm454, %v452
  %503 = vst.msk [vmem:[%s3 + $0xc0] sm:$0xf] %vm454, %v453
  // Predicated region
  $region14: #{tpu_custom_call.1} parent=0 // pred_check
    _
  $region15: #{tpu_custom_call.1} parent=0 // pred_check_branch
    %505 = sbr.rel (0) target = $region17
  $region16: #{tpu_custom_call.1} parent=0 // pred_region
    _
  $region17: #{tpu_custom_call.1} parent=0 // pred_fallthru
    _
  // Predicated region
  $region18: #{tpu_custom_call.1} parent=0 // pred_check
    _
  $region19: #{tpu_custom_call.1} parent=0 // pred_check_branch
    %507 = sbr.rel (0) target = $region21
  $region20: #{tpu_custom_call.1} parent=0 // pred_region
    _
  $region21: #{tpu_custom_call.1} parent=0 // pred_fallthru
    _

</llo_original>
